<compile_context>
chip_gen: v5e
topology: v5e:2x2
jax: 0.10.0
libtpu: 0.0.40
codegen_flags: <defaults>
</compile_context>

<pallas_src>
import jax
import jax.numpy as jnp
from jax.experimental import pallas as pl
from jax.experimental.pallas import tpu as pltpu

EPS = 1e-5


def residual_block_kernel(x_ref, w1_ref, w2_ref, p_ref, m_ref, o_ref):
    # x_ref: (C, R) f32 activations — channels on sublanes, N*L positions on lanes
    # w*_ref: (C, 3C) bf16 stacked conv weights (tap-major column blocks)
    # p_ref:  (C, 8) f32 packed per-channel params:
    #         cols = [conv1_b, bn1_g, bn1_b, conv2_b, bn2_g, bn2_b, 0, 0]
    # m_ref:  (2, R) f32 boundary masks: row0 = has-left-neighbour, row1 = has-right
    x = x_ref[...]
    C, R = x.shape
    inv_R = 1.0 / float(R)

    mprev = m_ref[0:1, :]   # (1, R): 1.0 where position r has r-1 inside its sequence
    mnext = m_ref[1:2, :]   # (1, R): 1.0 where position r has r+1 inside its sequence

    p = p_ref[...]
    b1, g1, be1 = p[:, 0:1], p[:, 1:2], p[:, 2:3]
    b2, g2, be2 = p[:, 3:4], p[:, 4:5], p[:, 5:6]

    def conv1d(z, w_ref, b):
        # Roll+mask the INPUT (XLU slot), stack on sublanes, one bf16 MXU matmul.
        zL = mprev * pltpu.roll(z, 1, axis=1)        # z[:, r-1], zeroed at seq starts
        zR = mnext * pltpu.roll(z, R - 1, axis=1)    # z[:, r+1], zeroed at seq ends
        zs = jnp.concatenate([zL, z, zR], axis=0).astype(jnp.bfloat16)   # (3C, R)
        y = jnp.dot(w_ref[...], zs, preferred_element_type=jnp.float32)  # (C, R) f32
        return y + b

    def batchnorm(z, g, beta):
        # Training-mode BN: biased batch stats over (N, L) == lanes; two-pass
        # variance (mean first) for numerical robustness, f32 throughout.
        mean = jnp.sum(z, axis=1, keepdims=True) * inv_R
        d = z - mean
        var = jnp.sum(d * d, axis=1, keepdims=True) * inv_R
        scale = g * jax.lax.rsqrt(var + EPS)
        return d * scale + beta                      # single FMA per element

    h = jnp.maximum(batchnorm(conv1d(x, w1_ref, b1), g1, be1), 0.0)
    h = batchnorm(conv1d(h, w2_ref, b2), g2, be2)
    o_ref[...] = jnp.maximum(h + x, 0.0)


def residual_block(x_ncl, params):
    """x_ncl: (N, C, L) float32 -> (N, C, L) float32."""
    N, C, L = x_ncl.shape
    R = N * L
    C_pad = ((C + 7) // 8) * 8   # keep sublane stacks / row blocks tile-aligned

    x = x_ncl.astype(jnp.float32)
    if C_pad != C:
        x = jnp.pad(x, ((0, 0), (0, C_pad - C), (0, 0)))

    # layout glue: NCL -> (C, N*L); lane-dense when N*L is a multiple of 128
    x2d = jnp.transpose(x, (1, 0, 2)).reshape(C_pad, R)

    def stack_taps(w):
        # (C_out, C_in, 3) -> (C_out, 3*C_in), tap-major column blocks, bf16 operand
        w = w.astype(jnp.float32)
        if C_pad != C:
            w = jnp.pad(w, ((0, C_pad - C), (0, C_pad - C), (0, 0)))
        return jnp.transpose(w, (0, 2, 1)).reshape(C_pad, 3 * C_pad).astype(jnp.bfloat16)

    def pad_c(v):
        v = v.astype(jnp.float32)
        if C_pad != C:
            v = jnp.pad(v, ((0, C_pad - C),))
        return v

    w1 = stack_taps(params["conv1_w"])
    w2 = stack_taps(params["conv2_w"])

    zeros_c = jnp.zeros((C_pad,), jnp.float32)
    pk = jnp.stack(
        [pad_c(params["conv1_b"]), pad_c(params["bn1_g"]), pad_c(params["bn1_b"]),
         pad_c(params["conv2_b"]), pad_c(params["bn2_g"]), pad_c(params["bn2_b"]),
         zeros_c, zeros_c],
        axis=1)                                        # (C_pad, 8), one tile, one DMA

    # Conv zero-padding masks, built once on the host side at (2, R).
    pos = jnp.arange(R, dtype=jnp.int32) % L
    masks = jnp.stack([pos != 0, pos != (L - 1)], axis=0).astype(jnp.float32)

    # VMEM budget from the actual footprint (leave headroom; stay < v7x's 64 MiB).
    act = C_pad * R * 4
    vmem_est = (2 * act                       # input + output block
                + 3 * C_pad * R * 2           # bf16 stacked conv operand
                + 4 * act                     # live f32 temporaries (conv out / d / h)
                + 2 * C_pad * 3 * C_pad * 2   # bf16 weights
                + (C_pad * 8 + 2 * R) * 4)    # packed params + masks
    vmem_limit = int(min(max(2 * vmem_est, 8 * 1024 * 1024), 56 * 1024 * 1024))
    # TODO(synk): once N*L grows past what fits here, switch to the R-tiled grid
    # with accumulator-based two-pass BN described at the top of the file.

    vmem = pl.BlockSpec(memory_space=pltpu.MemorySpace.VMEM)
    out2d = pl.pallas_call(
        residual_block_kernel,
        out_shape=jax.ShapeDtypeStruct((C_pad, R), jnp.float32),
        in_specs=[vmem, vmem, vmem, vmem, vmem],
        out_specs=vmem,
        input_output_aliases={0: 0},
        compiler_params=pltpu.CompilerParams(vmem_limit_bytes=vmem_limit),
    )(x2d, w1, w2, pk, masks)

    out = jnp.transpose(out2d.reshape(C_pad, N, L), (1, 0, 2))
    return out[:, :C, :]


def reference(x, params):
    """Pure-JAX f32 reference identical to the PyTorch forward (training-mode BN)."""
    def conv(z, w, b):
        y = jax.lax.conv_general_dilated(
            z, w, window_strides=(1,), padding=[(1, 1)],
            dimension_numbers=("NCH", "OIH", "NCH"))
        return y + b[None, :, None]

    def bn(z, g, be):
        mean = jnp.mean(z, axis=(0, 2), keepdims=True)
        var = jnp.mean((z - mean) ** 2, axis=(0, 2), keepdims=True)
        return (z - mean) * jax.lax.rsqrt(var + EPS) * g[None, :, None] + be[None, :, None]

    out = jax.nn.relu(bn(conv(x, params["conv1_w"], params["conv1_b"]),
                         params["bn1_g"], params["bn1_b"]))
    out = bn(conv(out, params["conv2_w"], params["conv2_b"]),
             params["bn2_g"], params["bn2_b"])
    return jax.nn.relu(out + x)


if __name__ == "__main__":
    N, C, L = 2, 8, 64   # batch, channels, sequence length (N*L = 128 lanes)
    key = jax.random.PRNGKey(0)
    keys = jax.random.split(key, 9)

    bound = 1.0 / jnp.sqrt(C * 3.0)  # kaiming-uniform-style bound for Conv1d
    params = {
        "conv1_w": jax.random.uniform(keys[0], (C, C, 3), jnp.float32, -bound, bound),
        "conv1_b": jax.random.uniform(keys[1], (C,), jnp.float32, -bound, bound),
        "conv2_w": jax.random.uniform(keys[2], (C, C, 3), jnp.float32, -bound, bound),
        "conv2_b": jax.random.uniform(keys[3], (C,), jnp.float32, -bound, bound),
        "bn1_g": 1.0 + 0.1 * jax.random.normal(keys[4], (C,), jnp.float32),
        "bn1_b": 0.1 * jax.random.normal(keys[5], (C,), jnp.float32),
        "bn2_g": 1.0 + 0.1 * jax.random.normal(keys[6], (C,), jnp.float32),
        "bn2_b": 0.1 * jax.random.normal(keys[7], (C,), jnp.float32),
    }

    x = jax.random.normal(keys[8], (N, C, L), jnp.float32)

    fwd = jax.jit(residual_block)
    out = jax.block_until_ready(fwd(x, params))
    ref = jax.block_until_ready(reference(x, params))

    max_err = float(jnp.max(jnp.abs(out - ref)))
    assert out.shape == (N, C, L), out.shape
    # bf16 MXU operands (f32 accumulation) => ~1e-3 typical error vs f32 reference.
    assert max_err < 2e-2, f"max abs error {max_err}"

    print("KERNEL_OK")
</pallas_src>

<mosaic_0001>
module attributes {stable_mosaic.version = 11 : i64} {
  func.func @residual_block_kernel(%arg0: memref<8x128xf32, #tpu.memory_space<vmem>>, %arg1: memref<8x24xbf16, #tpu.memory_space<vmem>>, %arg2: memref<8x24xbf16, #tpu.memory_space<vmem>>, %arg3: memref<8x8xf32, #tpu.memory_space<vmem>>, %arg4: memref<2x128xf32, #tpu.memory_space<vmem>>, %arg5: memref<8x128xf32, #tpu.memory_space<vmem>>) attributes {dimension_semantics = [], scalar_prefetch = 0 : i64, scratch_operands = 0 : i64, tpu.core_type = #tpu.core_type<tc>} {
    %c0 = arith.constant 0 : index
    %c0_0 = arith.constant 0 : index
    %0 = vector.load %arg0[%c0, %c0_0] : memref<8x128xf32, #tpu.memory_space<vmem>>, vector<8x128xf32>
    %c0_1 = arith.constant 0 : index
    %c0_2 = arith.constant 0 : index
    %1 = vector.load %arg4[%c0_1, %c0_2] : memref<2x128xf32, #tpu.memory_space<vmem>>, vector<1x128xf32>
    %c1 = arith.constant 1 : index
    %c0_3 = arith.constant 0 : index
    %2 = vector.load %arg4[%c1, %c0_3] : memref<2x128xf32, #tpu.memory_space<vmem>>, vector<1x128xf32>
    %c0_4 = arith.constant 0 : index
    %c0_5 = arith.constant 0 : index
    %3 = vector.load %arg3[%c0_4, %c0_5] : memref<8x8xf32, #tpu.memory_space<vmem>>, vector<8x8xf32>
    %4 = vector.extract_strided_slice %3 {offsets = [0, 0], sizes = [8, 1], strides = [1, 1]} : vector<8x8xf32> to vector<8x1xf32>
    %5 = vector.extract_strided_slice %3 {offsets = [0, 1], sizes = [8, 1], strides = [1, 1]} : vector<8x8xf32> to vector<8x1xf32>
    %6 = vector.extract_strided_slice %3 {offsets = [0, 2], sizes = [8, 1], strides = [1, 1]} : vector<8x8xf32> to vector<8x1xf32>
    %7 = vector.extract_strided_slice %3 {offsets = [0, 3], sizes = [8, 1], strides = [1, 1]} : vector<8x8xf32> to vector<8x1xf32>
    %8 = vector.extract_strided_slice %3 {offsets = [0, 4], sizes = [8, 1], strides = [1, 1]} : vector<8x8xf32> to vector<8x1xf32>
    %9 = vector.extract_strided_slice %3 {offsets = [0, 5], sizes = [8, 1], strides = [1, 1]} : vector<8x8xf32> to vector<8x1xf32>
    %c1_i32 = arith.constant 1 : i32
    %10 = tpu.dynamic_rotate %0 by %c1_i32 dim 1 : vector<8x128xf32>, i32 -> vector<8x128xf32>
    %11 = vector.broadcast %1 : vector<1x128xf32> to vector<8x128xf32>
    %12 = arith.mulf %11, %10 : vector<8x128xf32>
    %c127_i32 = arith.constant 127 : i32
    %13 = tpu.dynamic_rotate %0 by %c127_i32 dim 1 : vector<8x128xf32>, i32 -> vector<8x128xf32>
    %14 = vector.broadcast %2 : vector<1x128xf32> to vector<8x128xf32>
    %15 = arith.mulf %14, %13 : vector<8x128xf32>
    %16 = tpu.concatenate %12, %0, %15 in 0 : vector<8x128xf32>, vector<8x128xf32>, vector<8x128xf32> -> vector<24x128xf32>
    %17 = arith.truncf %16 : vector<24x128xf32> to vector<24x128xbf16>
    %c0_6 = arith.constant 0 : index
    %c0_7 = arith.constant 0 : index
    %18 = vector.load %arg1[%c0_6, %c0_7] : memref<8x24xbf16, #tpu.memory_space<vmem>>, vector<8x24xbf16>
    %cst = arith.constant dense<0.000000e+00> : vector<8x128xf32>
    %19 = tpu.matmul %18, %17, %cst {dimension_numbers = #tpu.dot_dimension_numbers<[1], [0], [0], [1], [0, 0, 1, 1], [], []>} : vector<8x24xbf16>, vector<24x128xbf16>, vector<8x128xf32> -> vector<8x128xf32>
    %20 = vector.broadcast %4 : vector<8x1xf32> to vector<8x128xf32>
    %21 = arith.addf %19, %20 : vector<8x128xf32>
    %cst_8 = arith.constant dense<0.000000e+00> : vector<8xf32>
    %22 = vector.multi_reduction <add>, %21, %cst_8 [1] : vector<8x128xf32> to vector<8xf32>
    %23 = vector.shape_cast %22 : vector<8xf32> to vector<8x1xf32>
    %cst_9 = arith.constant 7.812500e-03 : f32
    %24 = vector.broadcast %cst_9 : f32 to vector<8x1xf32>
    %25 = arith.mulf %23, %24 : vector<8x1xf32>
    %26 = vector.broadcast %25 : vector<8x1xf32> to vector<8x128xf32>
    %27 = arith.subf %21, %26 : vector<8x128xf32>
    %28 = arith.mulf %27, %27 : vector<8x128xf32>
    %cst_10 = arith.constant dense<0.000000e+00> : vector<8xf32>
    %29 = vector.multi_reduction <add>, %28, %cst_10 [1] : vector<8x128xf32> to vector<8xf32>
    %30 = vector.shape_cast %29 : vector<8xf32> to vector<8x1xf32>
    %cst_11 = arith.constant 7.812500e-03 : f32
    %31 = vector.broadcast %cst_11 : f32 to vector<8x1xf32>
    %32 = arith.mulf %30, %31 : vector<8x1xf32>
    %cst_12 = arith.constant 9.99999974E-6 : f32
    %33 = vector.broadcast %cst_12 : f32 to vector<8x1xf32>
    %34 = arith.addf %32, %33 : vector<8x1xf32>
    %35 = math.rsqrt %34 : vector<8x1xf32>
    %36 = arith.mulf %5, %35 : vector<8x1xf32>
    %37 = vector.broadcast %36 : vector<8x1xf32> to vector<8x128xf32>
    %38 = arith.mulf %27, %37 : vector<8x128xf32>
    %39 = vector.broadcast %6 : vector<8x1xf32> to vector<8x128xf32>
    %40 = arith.addf %38, %39 : vector<8x128xf32>
    %cst_13 = arith.constant 0.000000e+00 : f32
    %41 = vector.broadcast %cst_13 : f32 to vector<8x128xf32>
    %42 = arith.maximumf %40, %41 : vector<8x128xf32>
    %c1_i32_14 = arith.constant 1 : i32
    %43 = tpu.dynamic_rotate %42 by %c1_i32_14 dim 1 : vector<8x128xf32>, i32 -> vector<8x128xf32>
    %44 = vector.broadcast %1 : vector<1x128xf32> to vector<8x128xf32>
    %45 = arith.mulf %44, %43 : vector<8x128xf32>
    %c127_i32_15 = arith.constant 127 : i32
    %46 = tpu.dynamic_rotate %42 by %c127_i32_15 dim 1 : vector<8x128xf32>, i32 -> vector<8x128xf32>
    %47 = vector.broadcast %2 : vector<1x128xf32> to vector<8x128xf32>
    %48 = arith.mulf %47, %46 : vector<8x128xf32>
    %49 = tpu.concatenate %45, %42, %48 in 0 : vector<8x128xf32>, vector<8x128xf32>, vector<8x128xf32> -> vector<24x128xf32>
    %50 = arith.truncf %49 : vector<24x128xf32> to vector<24x128xbf16>
    %c0_16 = arith.constant 0 : index
    %c0_17 = arith.constant 0 : index
    %51 = vector.load %arg2[%c0_16, %c0_17] : memref<8x24xbf16, #tpu.memory_space<vmem>>, vector<8x24xbf16>
    %cst_18 = arith.constant dense<0.000000e+00> : vector<8x128xf32>
    %52 = tpu.matmul %51, %50, %cst_18 {dimension_numbers = #tpu.dot_dimension_numbers<[1], [0], [0], [1], [0, 0, 1, 1], [], []>} : vector<8x24xbf16>, vector<24x128xbf16>, vector<8x128xf32> -> vector<8x128xf32>
    %53 = vector.broadcast %7 : vector<8x1xf32> to vector<8x128xf32>
    %54 = arith.addf %52, %53 : vector<8x128xf32>
    %cst_19 = arith.constant dense<0.000000e+00> : vector<8xf32>
    %55 = vector.multi_reduction <add>, %54, %cst_19 [1] : vector<8x128xf32> to vector<8xf32>
    %56 = vector.shape_cast %55 : vector<8xf32> to vector<8x1xf32>
    %cst_20 = arith.constant 7.812500e-03 : f32
    %57 = vector.broadcast %cst_20 : f32 to vector<8x1xf32>
    %58 = arith.mulf %56, %57 : vector<8x1xf32>
    %59 = vector.broadcast %58 : vector<8x1xf32> to vector<8x128xf32>
    %60 = arith.subf %54, %59 : vector<8x128xf32>
    %61 = arith.mulf %60, %60 : vector<8x128xf32>
    %cst_21 = arith.constant dense<0.000000e+00> : vector<8xf32>
    %62 = vector.multi_reduction <add>, %61, %cst_21 [1] : vector<8x128xf32> to vector<8xf32>
    %63 = vector.shape_cast %62 : vector<8xf32> to vector<8x1xf32>
    %cst_22 = arith.constant 7.812500e-03 : f32
    %64 = vector.broadcast %cst_22 : f32 to vector<8x1xf32>
    %65 = arith.mulf %63, %64 : vector<8x1xf32>
    %cst_23 = arith.constant 9.99999974E-6 : f32
    %66 = vector.broadcast %cst_23 : f32 to vector<8x1xf32>
    %67 = arith.addf %65, %66 : vector<8x1xf32>
    %68 = math.rsqrt %67 : vector<8x1xf32>
    %69 = arith.mulf %8, %68 : vector<8x1xf32>
    %70 = vector.broadcast %69 : vector<8x1xf32> to vector<8x128xf32>
    %71 = arith.mulf %60, %70 : vector<8x128xf32>
    %72 = vector.broadcast %9 : vector<8x1xf32> to vector<8x128xf32>
    %73 = arith.addf %71, %72 : vector<8x128xf32>
    %74 = arith.addf %73, %0 : vector<8x128xf32>
    %cst_24 = arith.constant 0.000000e+00 : f32
    %75 = vector.broadcast %cst_24 : f32 to vector<8x128xf32>
    %76 = arith.maximumf %74, %75 : vector<8x128xf32>
    %c0_25 = arith.constant 0 : index
    %c0_26 = arith.constant 0 : index
    %77 = vector.load %arg5[%c0_25, %c0_26] : memref<8x128xf32, #tpu.memory_space<vmem>>, vector<8x128xf32>
    tpu.vector_store %arg5[%c0_25, %c0_26], %76 {strides = array<i32>} : memref<8x128xf32, #tpu.memory_space<vmem>>, vector<8x128xf32>,
    return
  }
}

</mosaic_0001>

<llo_original>
// kernel: residual_block.1
$region0: #{residual_block.1}
  #allocation0 [shape = 'u32[]', space=smem, size = 0x4, offset = 0x4, fixed_abs, tag = 'smem constant byte address 0x4 - core index']
  #allocation1 [shape = 'u32[72,128]{1,0:T(1,128)}', space=vmem, size = 0x9000, scoped, tag = 'internal scratch']
  %s0 = inlined_call_operand.vmem [shape: f32[8,128], index: 0, kind: input, shape index: {}, may-alias: {0,5}]
  %s1 = inlined_call_operand.vmem [shape: bf16[8,24], index: 1, kind: input, shape index: {}]
  %s2 = inlined_call_operand.vmem [shape: bf16[8,24], index: 2, kind: input, shape index: {}]
  %s3 = inlined_call_operand.vmem [shape: f32[8,8], index: 3, kind: input, shape index: {}]
  %s4 = inlined_call_operand.vmem [shape: f32[2,128], index: 4, kind: input, shape index: {}]
  %s5 = inlined_call_operand.vmem [shape: f32[8,128], index: 5, kind: output, shape index: {}, may-alias: {0,5}]
  %s6 = sld [smem:[#allocation0]]
  $region30: #{residual_block.1} parent=0
    _
  %s8 = ssub.s32 1, %s6
  %s9 = scalar_select 0, %s8, %s6
  // Predicated region
  $region2: #{residual_block.1} parent=0 // pred_check
    _
  $region3: #{residual_block.1} parent=0 // pred_check_branch
    %11 = sbr.rel (0) target = $region5
  $region4: #{residual_block.1} parent=0 // pred_region
    _
  $region5: #{residual_block.1} parent=0 // pred_fallthru
    _
  // Predicated region
  $region6: #{residual_block.1} parent=0 // pred_check
    _
  $region7: #{residual_block.1} parent=0 // pred_check_branch
    %13 = sbr.rel (0) target = $region9
  $region8: #{residual_block.1} parent=0 // pred_region
    _
  $region9: #{residual_block.1} parent=0 // pred_fallthru
    _
  // Predicated region
  $region10: #{residual_block.1} parent=0 // pred_check
    _
  $region11: #{residual_block.1} parent=0 // pred_check_branch
    %15 = sbr.rel (0) target = $region13
  $region12: #{residual_block.1} parent=0 // pred_region
    _
  $region13: #{residual_block.1} parent=0 // pred_fallthru
    _
  // Predicated region
  $region14: #{residual_block.1} parent=0 // pred_check
    _
  $region15: #{residual_block.1} parent=0 // pred_check_branch
    %17 = sbr.rel (0) target = $region17
  $region16: #{residual_block.1} parent=0 // pred_region
    _
  $region17: #{residual_block.1} parent=0 // pred_fallthru
    _
  // Predicated region
  $region18: #{residual_block.1} parent=0 // pred_check
    _
  $region19: #{residual_block.1} parent=0 // pred_check_branch
    %19 = sbr.rel (0) target = $region21
  $region20: #{residual_block.1} parent=0 // pred_region
    _
  $region21: #{residual_block.1} parent=0 // pred_fallthru
    _
  %v21 = vld [vmem:[%s0] sm:$0xff]
  %v22 = vld [vmem:[%s4] sm:$0x1]
  %v23 = vld [vmem:[%s4 + $0x1] sm:$0x1]
  %v24 = vld [vmem:[%s3] sm:$0xff]
  %25 = vrot.lane.b32.xlu0 %v21, 1
  %v26 = vpop.permute.xlu0 %25
  %v27 = vperm.slane %v22, 0
  %v28 = vmul.f32 %v27, %v26
  %29 = vrot.lane.b32.xlu0 %v21, 127
  %v30 = vpop.permute.xlu0 %29
  %v31 = vperm.slane %v23, 0
  %v32 = vmul.f32 %v31, %v30
  %v33 = vpack.c.bf16 %v21, %v28
  %v34 = vpack.c.bf16 %v32, %v32
  %v35 = vld [vmem:[%s1] sm:$0xf]
  %37 = vset.pattern.permute.xlu0 0
  %38 = vperm.xlu0 %37, %v24
  %v39 = vpop.permute.xlu0 %38
  %vm41 = vcmask 195584
  %v43 = vsel %vm41, %v35, 0
  %vm45 = vcmask 1043456
  %v47 = vsel %vm45, %v34, 0
  %49 = vmatpush.bf16.msra.mxu0 0
  %50 = vmatpush.bf16.msra.mxu0 0
  %51 = vmatpush.bf16.msra.mxu0 0
  %52 = vmatpush.bf16.msra.mxu0 0
  %53 = vmatpush.bf16.msra.mxu0 0
  %54 = vmatpush.bf16.msra.mxu0 0
  %55 = vmatpush.bf16.msra.mxu0 %v47
  %56 = vmatpush.bf16.msra.mxu0 %v33
  %57 = vmatmul.bf16.gmra.mxu0 %v43
  %v58 = vpop.f32.mrf.mxu0
  %v59 = vadd.f32 %v39, %v58
  %v60 = vpop.f32.mrf.mxu0
  %61 = vdwg.mxu0
  %62 = vadd.xlane.f32.xlu0 %v59
  %v63 = vpop.xlane.xlu0 %62
  %v64 = vmul.f32 %v63, 0.0078125
  %v65 = vsub.f32 %v59, %v64
  %v66 = vmul.f32 %v65, %v65
  %67 = vadd.xlane.f32.xlu0 %v66
  %v68 = vpop.xlane.xlu0 %67
  %v69 = vmul.f32 %v68, 0.0078125
  %v70 = vadd.f32 %v69, 1e-05
  %v71 = vrsqrt.pop %v70
  %v72 = vmul.f32 %v71, %v70
  %v73 = vmul.f32 %v72, %v71
  %v74 = vmul.f32 0.5, %v73
  %v75 = vsub.f32 1.5, %v74
  %v76 = vmul.f32 %v71, %v75
  %vm77 = vweird.f32 %v70
  %vm78 = vweird.f32 %v71
  %vm79 = vmor %vm77, %vm78
  %v80 = vsel %vm79, %v71, %v76
  %v81 = vmul.f32 %v24, %v80
  %83 = vset.pattern.permute.xlu0 1
  %84 = vperm.xlu0 %83, %v81
  %v85 = vpop.permute.xlu0 %84
  %v87 = vmul.f32 %v65, %v85
  %88 = vset.pattern.permute.xlu0 2
  %89 = vperm.xlu0 %88, %v24
  %v90 = vpop.permute.xlu0 %89
  %v92 = vadd.f32 %v87, %v90
  %v93 = vmax.f32 %v92, 0.0
  %94 = vrot.lane.b32.xlu0 %v93, 1
  %v95 = vpop.permute.xlu0 %94
  %v96 = vmul.f32 %v27, %v95
  %97 = vrot.lane.b32.xlu0 %v93, 127
  %v98 = vpop.permute.xlu0 %97
  %v99 = vmul.f32 %v31, %v98
  %v100 = vpack.c.bf16 %v93, %v96
  %v101 = vpack.c.bf16 %v99, %v99
  %v102 = vld [vmem:[%s2] sm:$0xf]
  %103 = vset.pattern.permute.xlu0 3
  %104 = vperm.xlu0 %103, %v24
  %v105 = vpop.permute.xlu0 %104
  %v108 = vsel %vm41, %v102, 0
  %v111 = vsel %vm45, %v101, 0
  %113 = vmatpush.bf16.msra.mxu0 0
  %114 = vmatpush.bf16.msra.mxu0 0
  %115 = vmatpush.bf16.msra.mxu0 0
  %116 = vmatpush.bf16.msra.mxu0 0
  %117 = vmatpush.bf16.msra.mxu0 0
  %118 = vmatpush.bf16.msra.mxu0 0
  %119 = vmatpush.bf16.msra.mxu0 %v111
  %120 = vmatpush.bf16.msra.mxu0 %v100
  %121 = vmatmul.bf16.gmra.mxu0 %v108
  %v122 = vpop.f32.mrf.mxu0
  %v123 = vadd.f32 %v105, %v122
  %v124 = vpop.f32.mrf.mxu0
  %125 = vdwg.mxu0
  %126 = vadd.xlane.f32.xlu0 %v123
  %v127 = vpop.xlane.xlu0 %126
  %v128 = vmul.f32 %v127, 0.0078125
  %v129 = vsub.f32 %v123, %v128
  %v130 = vmul.f32 %v129, %v129
  %131 = vadd.xlane.f32.xlu0 %v130
  %v132 = vpop.xlane.xlu0 %131
  %v133 = vmul.f32 %v132, 0.0078125
  %v134 = vadd.f32 %v133, 1e-05
  %v135 = vrsqrt.pop %v134
  %v136 = vmul.f32 %v135, %v134
  %v137 = vmul.f32 %v136, %v135
  %v138 = vmul.f32 0.5, %v137
  %v139 = vsub.f32 1.5, %v138
  %v140 = vmul.f32 %v135, %v139
  %vm141 = vweird.f32 %v134
  %vm142 = vweird.f32 %v135
  %vm143 = vmor %vm141, %vm142
  %v144 = vsel %vm143, %v135, %v140
  %v145 = vmul.f32 %v24, %v144
  %147 = vset.pattern.permute.xlu0 4
  %148 = vperm.xlu0 %147, %v145
  %v149 = vpop.permute.xlu0 %148
  %v151 = vmul.f32 %v129, %v149
  %152 = vset.pattern.permute.xlu0 5
  %153 = vperm.xlu0 %152, %v24
  %v154 = vpop.permute.xlu0 %153
  %v156 = vadd.f32 %v151, %v154
  %v157 = vadd.f32 %v156, %v21
  %v158 = vmax.f32 %v157, 0.0
  %159 = vst [vmem:[%s5] sm:$0xff] %v158
  // Predicated region
  $region22: #{residual_block.1} parent=0 // pred_check
    _
  $region23: #{residual_block.1} parent=0 // pred_check_branch
    %161 = sbr.rel (0) target = $region25
  $region24: #{residual_block.1} parent=0 // pred_region
    _
  $region25: #{residual_block.1} parent=0 // pred_fallthru
    _
  // Predicated region
  $region26: #{residual_block.1} parent=0 // pred_check
    _
  $region27: #{residual_block.1} parent=0 // pred_check_branch
    %163 = sbr.rel (0) target = $region29
  $region28: #{residual_block.1} parent=0 // pred_region
    _
  $region29: #{residual_block.1} parent=0 // pred_fallthru
    _

</llo_original>
